<compile_context>
chip_gen: v6e
topology: v6e:2x2x1
jax: 0.10.0
libtpu: 0.0.40
codegen_flags: <defaults>
</compile_context>

<pallas_src>
import functools

import jax
import jax.numpy as jnp
from jax.experimental import pallas as pl
from jax.experimental.pallas import tpu as pltpu


# ---------------------------------------------------------------------------
# Kernel
# ---------------------------------------------------------------------------
def _adain_kernel(x_ref, wb_ref, o_ref, *, eps, hw, chunk):
    """Per-instance normalization + affine on one (TR, HW) tile.

    x_ref : (TR, HW) input tile   (rows = instances b*C+c, lanes = H*W)
    wb_ref: (TR, 2)  fused [weight | bias] per row
    o_ref : (TR, HW) output tile

    All spatial work is done in lane chunks of width `chunk` with static,
    128-aligned slice starts, so no tile-sized f32 temporary is ever live.
    """
    tr = x_ref.shape[0]
    n_full = hw // chunk
    rem = hw - n_full * chunk
    inv_hw = 1.0 / float(hw)

    # ---- pass 1: per-row sum -> mean -------------------------------------
    s = jnp.zeros((tr, 1), jnp.float32)
    for c in range(n_full):
        xc = x_ref[:, c * chunk:(c + 1) * chunk].astype(jnp.float32)
        s = s + jnp.sum(xc, axis=-1, keepdims=True)
    if rem:
        xt = x_ref[:, n_full * chunk:].astype(jnp.float32)
        s = s + jnp.sum(xt, axis=-1, keepdims=True)
    mean = s * inv_hw

    # ---- pass 2: centered sum of squares -> biased variance --------------
    # Two-pass variance: the tile is VMEM-resident, so re-reading it is free
    # relative to the HBM roofline and avoids E[x^2]-E[x]^2 cancellation.
    mean_b = jnp.broadcast_to(mean, (tr, chunk))     # hoisted, not per-chunk
    css = jnp.zeros((tr, 1), jnp.float32)
    for c in range(n_full):
        xc = x_ref[:, c * chunk:(c + 1) * chunk].astype(jnp.float32) - mean_b
        css = css + jnp.sum(xc * xc, axis=-1, keepdims=True)
    if rem:
        xt = x_ref[:, n_full * chunk:].astype(jnp.float32) - mean_b[:, :rem]
        css = css + jnp.sum(xt * xt, axis=-1, keepdims=True)
    var = css * inv_hw                                # biased (F.batch_norm, training=True)
    inv = jax.lax.rsqrt(var + eps)                    # EUP slot

    # ---- fold normalization + affine into one per-row scale/shift --------
    wb = wb_ref[...].astype(jnp.float32)
    scale = wb[:, 0:1] * inv
    shift = wb[:, 1:2] - mean * scale

    # ---- pass 3: out = x * scale + shift, chunk by chunk -----------------
    scale_b = jnp.broadcast_to(scale, (tr, chunk))    # hoisted broadcasts
    shift_b = jnp.broadcast_to(shift, (tr, chunk))
    for c in range(n_full):
        xc = x_ref[:, c * chunk:(c + 1) * chunk].astype(jnp.float32)
        o_ref[:, c * chunk:(c + 1) * chunk] = (xc * scale_b + shift_b).astype(o_ref.dtype)
    if rem:
        xt = x_ref[:, n_full * chunk:].astype(jnp.float32)
        o_ref[:, n_full * chunk:] = (
            xt * scale_b[:, :rem] + shift_b[:, :rem]).astype(o_ref.dtype)


# ---------------------------------------------------------------------------
# Tiling / VMEM heuristics
# ---------------------------------------------------------------------------
_MIN_TILE_BYTES = 2 << 20     # DMA-efficiency plateau starts around here
_MAX_TILE_BYTES = 8 << 20
_TGT_TILE_BYTES = 4 << 20


def _round_down(v, m):
    return (v // m) * m


def _pick_chunk(hw, max_chunks=32):
    """Lane-chunk width for the in-kernel passes (512-2048 lanes, mult. of 128)."""
    if hw <= 512:
        return hw                              # single static full-width slice
    c = max(512, -(-hw // max_chunks))         # bound the number of unrolled bodies
    c = -(-c // 128) * 128                     # 128-aligned -> unmasked vector loads
    return min(c, hw)


def _vmem_config(vmem_budget_bytes, vmem_limit_bytes):
    """Generation-aware VMEM budgets: v7x has 64 MiB, v5e/v6e have 128 MiB."""
    if vmem_budget_bytes is not None and vmem_limit_bytes is not None:
        return vmem_budget_bytes, vmem_limit_bytes
    cap = None
    try:
        cap = getattr(pltpu.get_tpu_info(), "vmem_capacity_bytes", None)
    except Exception:
        cap = None
    if cap is None:
        cap = 64 << 20                          # conservative: assume v7x-sized VMEM
    if cap >= (96 << 20):                       # v5e / v6e (128 MiB physical)
        budget, limit = 48 << 20, 100 << 20
    else:                                       # v7x (64 MiB physical)
        budget, limit = 14 << 20, 44 << 20
    if vmem_budget_bytes is None:
        vmem_budget_bytes = budget
    if vmem_limit_bytes is None:
        vmem_limit_bytes = limit
    return vmem_budget_bytes, vmem_limit_bytes


def _pick_tile_rows(BC, HW, itemsize, pack, chunk, vmem_budget_bytes):
    # Live VMEM per block-row (what actually coexists, incl. in-kernel f32):
    #   in + out tiles, double-buffered ................. 4 * HW * itemsize
    #   fused (w|b) tile, lane-padded to 128, x2 ........ 2 * 128 * 4
    #   chunk-width f32 working set (~4 live arrays) .... 4 * chunk * 4
    #   per-row f32 stats (mean/var/scale/..., padded) .. 6 * 128 * 4
    row_vmem = 4 * HW * itemsize + 2 * 128 * 4 + 4 * chunk * 4 + 6 * 128 * 4
    cap = max(pack, _round_down(vmem_budget_bytes // row_vmem, pack))

    if BC <= pack:
        # Full-extent block (allowed regardless of the (8,128) rule).
        # TODO(synk): a single grid step leaves one v7x TensorCore idle for the
        # tiny-batch case; a two-phase HW split (stats into resident scratch,
        # then apply) would fix that without a second HBM read of x.
        return BC

    x_row = HW * itemsize
    best, best_key = None, None
    for d in range(pack, min(BC, cap) + 1, pack):
        if BC % d:
            continue
        steps = BC // d
        tile_bytes = d * x_row
        key = (
            steps >= 4 and steps % 2 == 0,                      # even, >=4 steps: TC balance + pipeline
            _MIN_TILE_BYTES <= tile_bytes <= _MAX_TILE_BYTES,   # past the DMA plateau, not huge
            steps >= 2,
            -abs(tile_bytes - _TGT_TILE_BYTES),                 # then closest to ~4 MiB
        )
        if best_key is None or key > best_key:
            best_key, best = key, d
    if best is not None:
        return best

    # No aligned divisor of BC fits the budget: use a ragged last tile.
    # OOB rows in the final block do throwaway per-row work (garbage stats)
    # but are never written back, so they are harmless.
    tgt = max(pack, _round_down(_TGT_TILE_BYTES // x_row, pack))
    return max(pack, min(cap, tgt, _round_down(BC, pack)))


# ---------------------------------------------------------------------------
# Wrapper
# ---------------------------------------------------------------------------
def adaptive_instance_norm2d(x, weight, bias, *, eps=1e-5, tile_rows=None,
                             chunk=None, vmem_budget_bytes=None,
                             vmem_limit_bytes=None):
    """x: (B, C, H, W); weight, bias: (B*C,). Returns (B, C, H, W)."""
    B, C, H, W = x.shape
    BC, HW = B * C, H * W
    assert weight.shape == (BC,) and bias.shape == (BC,), \
        "AdaIN weight/bias must have shape (B*C,)"

    x2 = x.reshape(BC, HW)                                   # metadata-only reshape
    wb = jnp.stack([weight.astype(jnp.float32),
                    bias.astype(jnp.float32)], axis=-1)      # (BC, 2)

    itemsize = jnp.dtype(x.dtype).itemsize
    pack = max(8, 32 // itemsize)       # sublane packing: 8 f32 / 16 bf16 / 32 int8

    vmem_budget_bytes, vmem_limit_bytes = _vmem_config(vmem_budget_bytes,
                                                       vmem_limit_bytes)
    if chunk is None:
        chunk = _pick_chunk(HW)
    if tile_rows is None:
        tile_rows = _pick_tile_rows(BC, HW, itemsize, pack, chunk,
                                    vmem_budget_bytes)

    grid = (pl.cdiv(BC, tile_rows),)

    cost = pl.CostEstimate(
        flops=7 * BC * HW,                                   # sum + centered sq + apply
        bytes_accessed=2 * BC * HW * itemsize + BC * 8,
        transcendentals=BC,                                  # one rsqrt per instance
    )

    out2 = pl.pallas_call(
        functools.partial(_adain_kernel, eps=eps, hw=HW, chunk=chunk),
        out_shape=jax.ShapeDtypeStruct((BC, HW), x.dtype),
        grid_spec=pl.GridSpec(
            grid=grid,
            in_specs=[
                pl.BlockSpec((tile_rows, HW), lambda i: (i, 0)),
                pl.BlockSpec((tile_rows, 2), lambda i: (i, 0)),
            ],
            out_specs=pl.BlockSpec((tile_rows, HW), lambda i: (i, 0)),
        ),
        compiler_params=pltpu.CompilerParams(
            dimension_semantics=("parallel",),
            vmem_limit_bytes=vmem_limit_bytes),
        cost_estimate=cost,
    )(x2, wb)

    # TODO(synk): when HW % 128 != 0 (late-VGG 14x14 / 7x7 maps) the lane axis
    # is padded and stores become masked; grouping several instances per block
    # row with segmented in-kernel reductions would restore lane-dense stores.
    return out2.reshape(B, C, H, W)


# ---------------------------------------------------------------------------
# Reference + self-test
# ---------------------------------------------------------------------------
def _reference(x, weight, bias, eps=1e-5):
    B, C, H, W = x.shape
    xr = x.reshape(B * C, H * W).astype(jnp.float32)
    mean = xr.mean(axis=-1, keepdims=True)
    var = ((xr - mean) ** 2).mean(axis=-1, keepdims=True)    # biased variance
    out = (xr - mean) * jax.lax.rsqrt(var + eps)
    out = out * weight[:, None] + bias[:, None]
    return out.reshape(B, C, H, W).astype(x.dtype)


def _run_case(key, B, C, H, W):
    kx, kw, kb = jax.random.split(key, 3)
    x = jax.random.normal(kx, (B, C, H, W), dtype=jnp.float32)
    weight = 1.0 + 0.1 * jax.random.normal(kw, (B * C,), dtype=jnp.float32)
    bias = 0.1 * jax.random.normal(kb, (B * C,), dtype=jnp.float32)

    out = adaptive_instance_norm2d(x, weight, bias, eps=1e-5)
    out = jax.block_until_ready(out)

    ref = _reference(x, weight, bias, eps=1e-5)
    assert out.shape == (B, C, H, W)
    assert jnp.allclose(out, ref, atol=1e-4, rtol=1e-4), \
        f"mismatch vs reference for shape {(B, C, H, W)}"


if __name__ == "__main__":
    key = jax.random.PRNGKey(0)
    k1, k2, k3 = jax.random.split(key, 3)

    # Primary case (B=2, C=4, 16x16): BC <= pack -> full-extent single block.
    _run_case(k1, 2, 4, 16, 16)
    # Multi-step grid case: BC=32 -> tile_rows=8, 4 even grid steps.
    _run_case(k2, 2, 16, 16, 16)
    # Ragged case: BC=21 has no aligned divisor -> ragged last tile path.
    _run_case(k3, 3, 7, 16, 16)

    # TODO(synk): the surrounding VGG_AdaIN backbone (conv/pool stack,
    # leaky_relu, latent concatenation) is standard XLA territory and is not
    # re-implemented as a Pallas kernel here.
    print("KERNEL_OK")
</pallas_src>

<mosaic_0001>
module attributes {stable_mosaic.version = 11 : i64} {
  func.func @_adain_kernel(%arg0: i32, %arg1: memref<8x256xf32, #tpu.memory_space<vmem>>, %arg2: memref<8x2xf32, #tpu.memory_space<vmem>>, %arg3: memref<8x256xf32, #tpu.memory_space<vmem>>) attributes {dimension_semantics = [#tpu.dimension_semantics<parallel>], iteration_bounds = array<i64: 1>, scalar_prefetch = 0 : i64, scratch_operands = 0 : i64, tpu.core_type = #tpu.core_type<tc>, window_params = [{transform_indices = @transform_0, window_bounds = array<i64: 8, 256>}, {transform_indices = @transform_1, window_bounds = array<i64: 8, 2>}, {transform_indices = @transform_2, window_bounds = array<i64: 8, 256>}]} {
    %cst = arith.constant 0.000000e+00 : f32
    %0 = vector.broadcast %cst : f32 to vector<8x1xf32>
    %c0 = arith.constant 0 : index
    %c0_0 = arith.constant 0 : index
    %1 = vector.load %arg1[%c0, %c0_0] : memref<8x256xf32, #tpu.memory_space<vmem>>, vector<8x256xf32>
    %cst_1 = arith.constant dense<0.000000e+00> : vector<8xf32>
    %2 = vector.multi_reduction <add>, %1, %cst_1 [1] : vector<8x256xf32> to vector<8xf32>
    %3 = vector.shape_cast %2 : vector<8xf32> to vector<8x1xf32>
    %4 = arith.addf %0, %3 : vector<8x1xf32>
    %cst_2 = arith.constant 3.906250e-03 : f32
    %5 = vector.broadcast %cst_2 : f32 to vector<8x1xf32>
    %6 = arith.mulf %4, %5 : vector<8x1xf32>
    %7 = vector.shape_cast %6 : vector<8x1xf32> to vector<8x1xf32>
    %8 = vector.broadcast %7 : vector<8x1xf32> to vector<8x256xf32>
    %cst_3 = arith.constant 0.000000e+00 : f32
    %9 = vector.broadcast %cst_3 : f32 to vector<8x1xf32>
    %c0_4 = arith.constant 0 : index
    %c0_5 = arith.constant 0 : index
    %10 = vector.load %arg1[%c0_4, %c0_5] : memref<8x256xf32, #tpu.memory_space<vmem>>, vector<8x256xf32>
    %11 = arith.subf %10, %8 : vector<8x256xf32>
    %12 = arith.mulf %11, %11 : vector<8x256xf32>
    %cst_6 = arith.constant dense<0.000000e+00> : vector<8xf32>
    %13 = vector.multi_reduction <add>, %12, %cst_6 [1] : vector<8x256xf32> to vector<8xf32>
    %14 = vector.shape_cast %13 : vector<8xf32> to vector<8x1xf32>
    %15 = arith.addf %9, %14 : vector<8x1xf32>
    %cst_7 = arith.constant 3.906250e-03 : f32
    %16 = vector.broadcast %cst_7 : f32 to vector<8x1xf32>
    %17 = arith.mulf %15, %16 : vector<8x1xf32>
    %cst_8 = arith.constant 9.99999974E-6 : f32
    %18 = vector.broadcast %cst_8 : f32 to vector<8x1xf32>
    %19 = arith.addf %17, %18 : vector<8x1xf32>
    %20 = math.rsqrt %19 : vector<8x1xf32>
    %c0_9 = arith.constant 0 : index
    %c0_10 = arith.constant 0 : index
    %21 = vector.load %arg2[%c0_9, %c0_10] : memref<8x2xf32, #tpu.memory_space<vmem>>, vector<8x2xf32>
    %22 = vector.extract_strided_slice %21 {offsets = [0, 0], sizes = [8, 1], strides = [1, 1]} : vector<8x2xf32> to vector<8x1xf32>
    %23 = arith.mulf %22, %20 : vector<8x1xf32>
    %24 = vector.extract_strided_slice %21 {offsets = [0, 1], sizes = [8, 1], strides = [1, 1]} : vector<8x2xf32> to vector<8x1xf32>
    %25 = arith.mulf %6, %23 : vector<8x1xf32>
    %26 = arith.subf %24, %25 : vector<8x1xf32>
    %27 = vector.shape_cast %23 : vector<8x1xf32> to vector<8x1xf32>
    %28 = vector.broadcast %27 : vector<8x1xf32> to vector<8x256xf32>
    %29 = vector.shape_cast %26 : vector<8x1xf32> to vector<8x1xf32>
    %30 = vector.broadcast %29 : vector<8x1xf32> to vector<8x256xf32>
    %c0_11 = arith.constant 0 : index
    %c0_12 = arith.constant 0 : index
    %31 = vector.load %arg1[%c0_11, %c0_12] : memref<8x256xf32, #tpu.memory_space<vmem>>, vector<8x256xf32>
    %32 = arith.mulf %31, %28 : vector<8x256xf32>
    %33 = arith.addf %32, %30 : vector<8x256xf32>
    %c0_13 = arith.constant 0 : index
    %c0_14 = arith.constant 0 : index
    %34 = vector.load %arg3[%c0_13, %c0_14] : memref<8x256xf32, #tpu.memory_space<vmem>>, vector<8x256xf32>
    tpu.vector_store %arg3[%c0_13, %c0_14], %33 {strides = array<i32>} : memref<8x256xf32, #tpu.memory_space<vmem>>, vector<8x256xf32>,
    return
  }
  func.func @transform_0(%arg0: i32) -> (i32, i32) {
    %c0_i32 = arith.constant 0 : i32
    %c0_i32_0 = arith.constant 0 : i32
    return %arg0, %c0_i32 : i32, i32
  }
  func.func @transform_1(%arg0: i32) -> (i32, i32) {
    %c0_i32 = arith.constant 0 : i32
    %c0_i32_0 = arith.constant 0 : i32
    return %arg0, %c0_i32 : i32, i32
  }
  func.func @transform_2(%arg0: i32) -> (i32, i32) {
    %c0_i32 = arith.constant 0 : i32
    %c0_i32_0 = arith.constant 0 : i32
    return %arg0, %c0_i32 : i32, i32
  }
}

</mosaic_0001>

<llo_original>
// kernel: tpu_custom_call.1
$region0: #{tpu_custom_call.1}
  #allocation0 [shape = 'u32[]', space=smem, size = 0x4, offset = 0x4, fixed_abs, tag = 'smem constant byte address 0x4 - core index']
  #allocation1 [shape = 'u32[144,128]{1,0:T(1,128)}', space=vmem, size = 0x12000, scoped, tag = 'internal scratch']
  %s0 = inlined_call_operand.hbm [shape: f32[8,256], index: 0, kind: input, shape index: {}]
  %s1 = inlined_call_operand.vmem [shape: f32[8,2], index: 1, kind: input, shape index: {}]
  %s2 = inlined_call_operand.hbm [shape: f32[8,256], index: 2, kind: output, shape index: {}]
  %s3 = sld [smem:[#allocation0]]
  $region22: #{tpu_custom_call.1} parent=0
    _
  %s5 = ssub.s32 1, %s3
  %s6 = scalar_select 0, %s5, %s3
  $region1: #{tpu_custom_call.1} parent=0
    #allocation2 [shape = 'u8[8192]{0}', space=vmem, size = 0x2000, scoped, tag = 'input window, operand 0, single buffered']
    #allocation3 [shape = 's32[1]{0}', space=sflag, size = 0x4, scoped, tag = 'scoped memory for tpu_custom_call.1']
    #allocation4 [shape = 's32[1]{0}', space=sflag, size = 0x4, scoped, tag = 'scoped memory for tpu_custom_call.1']
    #allocation5 [shape = 'u8[8192]{0}', space=vmem, size = 0x2000, scoped, tag = 'output window, operand 0, single buffered']
    %7 = vsyncpa [#allocation3], 0
    %8 = vsyncpa [#allocation4], 0
    // Predicated region
    $region2: #{tpu_custom_call.1} parent=1 // pred_check
      _
    $region3: #{tpu_custom_call.1} parent=1 // pred_check_branch
      %10 = sbr.rel (0) target = $region5
    $region4: #{tpu_custom_call.1} parent=1 // pred_region
      %s12 = ssub.s32 256, 256
      %13 = vsyncadd [#allocation3], %s12
      %s15 = sshll.u32 [#allocation2], 4
      %s16 = int_to_ptr.vmem [resolvable:$true] %s15
      %18 = dma.hbm_to_vmem [thread:$0]  %s0, 256, %s16, [#allocation3]
    $region5: #{tpu_custom_call.1} parent=1 // pred_fallthru
      _
    // Predicated region
    $region6: #{tpu_custom_call.1} parent=1 // pred_check
      _
    $region7: #{tpu_custom_call.1} parent=1 // pred_check_branch
      %20 = sbr.rel (0) target = $region9
    $region8: #{tpu_custom_call.1} parent=1 // pred_region
      _
    $region9: #{tpu_custom_call.1} parent=1 // pred_fallthru
      _
    // Predicated region
    $region10: #{tpu_custom_call.1} parent=1 // pred_check
      _
    $region11: #{tpu_custom_call.1} parent=1 // pred_check_branch
      %22 = sbr.rel (0) target = $region13
    $region12: #{tpu_custom_call.1} parent=1 // pred_region
      %23 = dma.done [#allocation3], 256
    $region13: #{tpu_custom_call.1} parent=1 // pred_fallthru
      _
    %v24 = vld [vmem:[#allocation2] sm:$0xff]
    %v25 = vld [vmem:[#allocation2 + $0x8] sm:$0xff]
    %v26 = vadd.f32 %v24, %v25
    %27 = vadd.xlane.f32.xlu0 %v26
    %v28 = vpop.xlane.xlu0 %27
    %v29 = vadd.f32 %v28, 0.0
    %v30 = vmul.f32 %v29, 0.00390625
    %v31 = vsub.f32 %v24, %v30
    %v32 = vsub.f32 %v25, %v30
    %v33 = vmul.f32 %v31, %v31
    %v34 = vmul.f32 %v32, %v32
    %v35 = vadd.f32 %v33, %v34
    %36 = vadd.xlane.f32.xlu0 %v35
    %v37 = vpop.xlane.xlu0 %36
    %v38 = vadd.f32 %v37, 0.0
    %v39 = vmul.f32 %v38, 0.00390625
    %v40 = vadd.f32 %v39, 1e-05
    %v41 = vrsqrt.pop %v40
    %v42 = vld [vmem:[%s1] sm:$0xff]
    %v43 = vmul.f32 %v42, %v41
    %v44 = vmul.f32 %v30, %v43
    %46 = vrot.lane.b32.xlu0 %v44, 1
    %v47 = vpop.permute.xlu0 %46
    %v49 = vsub.f32 %v42, %v47
    %51 = vset.pattern.permute.xlu0 0
    %52 = vperm.xlu0 %51, %v43
    %v53 = vpop.permute.xlu0 %52
    %56 = vset.pattern.permute.xlu0 1
    %57 = vperm.xlu0 %56, %v49
    %v58 = vpop.permute.xlu0 %57
    %v60 = vmul.f32 %v24, %v53
    %v61 = vmul.f32 %v25, %v53
    %v62 = vadd.f32 %v60, %v58
    %v63 = vadd.f32 %v61, %v58
    %64 = vst [vmem:[#allocation5] sm:$0xff] %v62
    %65 = vst [vmem:[#allocation5 + $0x8] sm:$0xff] %v63
    // Predicated region
    $region14: #{tpu_custom_call.1} parent=1 // pred_check
      _
    $region15: #{tpu_custom_call.1} parent=1 // pred_check_branch
      %67 = sbr.rel (0) target = $region17
    $region16: #{tpu_custom_call.1} parent=1 // pred_region
      %s69 = ssub.s32 256, 256
      %70 = vsyncadd [#allocation4], %s69
      %s72 = sshll.u32 [#allocation5], 4
      %s73 = int_to_ptr.vmem [resolvable:$true] %s72
      %75 = dma.vmem_to_hbm [thread:$0]  %s73, 256, %s2, [#allocation4]
    $region17: #{tpu_custom_call.1} parent=1 // pred_fallthru
      _
    // Predicated region
    $region18: #{tpu_custom_call.1} parent=1 // pred_check
      _
    $region19: #{tpu_custom_call.1} parent=1 // pred_check_branch
      %77 = sbr.rel (0) target = $region21
    $region20: #{tpu_custom_call.1} parent=1 // pred_region
      %78 = dma.done [#allocation4], 256
    $region21: #{tpu_custom_call.1} parent=1 // pred_fallthru
      _
    %79 = vsyncpa [#allocation3], 1
    %80 = vsyncpa [#allocation4], 1

</llo_original>
